<compile_context>
chip_gen: v6e
topology: v6e:2x2x1
jax: 0.10.0
libtpu: 0.0.40
codegen_flags: <defaults>
</compile_context>

<pallas_src>
import jax
import jax.numpy as jnp
from jax.experimental import pallas as pl
from jax.experimental.pallas import tpu as pltpu

EPS = 1e-5
HIDDEN = 208          # original hidden width
CLASSES = 104         # original class count
HIDDEN_PAD = 256      # MXU/lane-friendly hidden width
OUT_PAD = 128         # lane-dense output width
IN_PAD = 128          # lane-dense input feature width
NEG_INF = -1e30
TB_MAX = 2048         # max batch-tile rows per grid step


def _round_up(x, m):
    return ((x + m - 1) // m) * m


def _choose_tiling(B):
    """Adaptive batch tiling: single step for small B, bounded padding for big B."""
    b_pad = _round_up(max(B, 16), 16)
    if b_pad <= TB_MAX:
        return b_pad, b_pad                    # one grid step, no extra waste
    b_pad = _round_up(B, 256)                  # padding waste <= 255 rows
    for tb in range(TB_MAX, 0, -256):          # largest multiple-of-256 divisor
        if b_pad % tb == 0:
            return b_pad, tb
    return b_pad, 256


def mlp_kernel(x_ref, w1_ref, b1_ref, w2_ref, b2_ref, w3_ref, b3_ref, out_ref):
    # fc1 (input affine + bn1 folded into W1/b1) -> relu
    h = jnp.dot(x_ref[...], w1_ref[...],
                preferred_element_type=jnp.float32) + b1_ref[...]
    h = jnp.maximum(h, 0.0)

    # fc2 (bn2 folded into W2/b2) -> relu
    h = jnp.dot(h.astype(jnp.bfloat16), w2_ref[...],
                preferred_element_type=jnp.float32) + b2_ref[...]
    h = jnp.maximum(h, 0.0)

    # fc3 -> softmax over the padded class axis (padded logits biased to -1e30)
    logits = jnp.dot(h.astype(jnp.bfloat16), w3_ref[...],
                     preferred_element_type=jnp.float32) + b3_ref[...]
    m = jnp.max(logits, axis=-1, keepdims=True)
    e = jnp.exp(logits - m)
    inv = pl.reciprocal(jnp.sum(e, axis=-1, keepdims=True), approx=True)
    out_ref[...] = (e * inv).astype(out_ref.dtype)     # bf16 store (halved writeback)


def make_params(key, emb_dims, no_of_cont):
    """Deterministic parameter init (synthetic, not a checkpoint)."""
    ks = iter(jax.random.split(key, 32))
    p = {}
    p["emb_tables"] = [jax.random.normal(next(ks), (n, d), jnp.float32) * 0.1
                       for (n, d) in emb_dims]
    no_of_embs = sum(d for _, d in emb_dims)
    in_dim = no_of_embs + no_of_cont

    def linear(k, din, dout):
        kw, kb = jax.random.split(k)
        w = jax.random.normal(kw, (din, dout), jnp.float32) * (1.0 / jnp.sqrt(din))
        b = jax.random.normal(kb, (1, dout), jnp.float32) * 0.01
        return w, b

    def bn(k, d):
        kg, kb, km, kv = jax.random.split(k, 4)
        gamma = 1.0 + 0.1 * jax.random.normal(kg, (1, d), jnp.float32)
        beta = 0.1 * jax.random.normal(kb, (1, d), jnp.float32)
        mean = 0.1 * jax.random.normal(km, (1, d), jnp.float32)
        var = jnp.abs(1.0 + 0.1 * jax.random.normal(kv, (1, d), jnp.float32))
        return gamma, beta, mean, var

    p["fc1"] = linear(next(ks), in_dim, HIDDEN)
    p["bn1"] = bn(next(ks), HIDDEN)
    p["fc2"] = linear(next(ks), HIDDEN, HIDDEN)
    p["bn2"] = bn(next(ks), HIDDEN)
    p["fc3"] = linear(next(ks), HIDDEN, CLASSES)
    if no_of_cont:
        p["bn_cont"] = bn(next(ks), no_of_cont)
    p["no_of_embs"] = no_of_embs
    p["no_of_cont"] = no_of_cont
    return p


def classification_embd_nn(params, x_cat, x_cont=None):
    """Forward pass. x_cat: (B, n_emb) int32, x_cont: (B, no_of_cont) f32."""
    # --- glue: embedding lookups + concat (data-dependent gather on tiny tables) ---
    embs = [tbl[x_cat[:, i]] for i, tbl in enumerate(params["emb_tables"])]
    x_emb = jnp.concatenate(embs, axis=1)                       # (B, no_of_embs)
    B = x_emb.shape[0]
    no_of_embs, no_of_cont = params["no_of_embs"], params["no_of_cont"]
    in_dim = no_of_embs + no_of_cont
    in_pad = _round_up(max(in_dim, IN_PAD), IN_PAD)

    w1, b1 = params["fc1"]; g1, be1, m1, v1 = params["bn1"]
    w2, b2 = params["fc2"]; g2, be2, m2, v2 = params["bn2"]
    w3, b3 = params["fc3"]

    # --- fold eval-mode bn_cont into an input affine ---
    in_scale = jnp.ones((1, in_dim), jnp.float32)
    in_shift = jnp.zeros((1, in_dim), jnp.float32)
    if no_of_cont:
        gc, bc, mc, vc = params["bn_cont"]
        sc = gc * jax.lax.rsqrt(vc + EPS)
        in_scale = in_scale.at[:, no_of_embs:].set(sc)
        in_shift = in_shift.at[:, no_of_embs:].set(bc - mc * sc)
        x = jnp.concatenate([x_emb, x_cont.astype(jnp.float32)], axis=1)
    else:
        x = x_emb

    # --- fold input affine + bn1 into fc1, bn2 into fc2 (same affine algebra) ---
    a1 = g1 * jax.lax.rsqrt(v1 + EPS)                    # (1, 208)
    w1f = (in_scale.T * w1) * a1                         # (in_dim, 208)
    b1f = (in_shift @ w1 + b1) * a1 + (be1 - m1 * a1)    # (1, 208)

    a2 = g2 * jax.lax.rsqrt(v2 + EPS)
    w2f = w2 * a2
    b2f = b2 * a2 + (be2 - m2 * a2)

    # --- pad: in_dim -> 128, hidden 208 -> 256, classes 104 -> 128 ---
    # (padded W1 rows are zero, so the zero-padded x columns contribute nothing)
    w1p = jnp.zeros((in_pad, HIDDEN_PAD), jnp.float32).at[:in_dim, :HIDDEN].set(w1f)
    b1p = jnp.zeros((1, HIDDEN_PAD), jnp.float32).at[:, :HIDDEN].set(b1f)
    w2p = jnp.zeros((HIDDEN_PAD, HIDDEN_PAD), jnp.float32).at[:HIDDEN, :HIDDEN].set(w2f)
    b2p = jnp.zeros((1, HIDDEN_PAD), jnp.float32).at[:, :HIDDEN].set(b2f)
    w3p = jnp.zeros((HIDDEN_PAD, OUT_PAD), jnp.float32).at[:HIDDEN, :CLASSES].set(w3)
    b3p = jnp.full((1, OUT_PAD), NEG_INF, jnp.float32).at[:, :CLASSES].set(b3)

    # --- bf16 matmul operands (f32 accumulation inside the kernel) ---
    w1b = w1p.astype(jnp.bfloat16)
    w2b = w2p.astype(jnp.bfloat16)
    w3b = w3p.astype(jnp.bfloat16)

    # --- batch tiling: TB rows per grid step, weights resident across steps ---
    B_pad, TB = _choose_tiling(B)
    x_bf = jnp.zeros((B_pad, in_pad), jnp.bfloat16).at[:B, :in_dim].set(
        x.astype(jnp.bfloat16))                          # lane-dense 128-wide input
    grid = (B_pad // TB,)

    flops = 2 * B_pad * (in_pad * HIDDEN_PAD
                         + HIDDEN_PAD * HIDDEN_PAD
                         + HIDDEN_PAD * OUT_PAD)
    bytes_accessed = (x_bf.size * 2
                      + (w1b.size + w2b.size + w3b.size) * 2
                      + (b1p.size + b2p.size + b3p.size) * 4
                      + B_pad * OUT_PAD * 2)             # bf16 output
    cost = pl.CostEstimate(flops=flops,
                           transcendentals=B_pad * OUT_PAD,
                           bytes_accessed=bytes_accessed)

    # VMEM budget: ~2x live buffers (+headroom), floor 32 MiB (lifts v5e's 16 MiB
    # default scoped limit), cap 48 MiB (under v7x's 64 MiB/TC physical VMEM).
    weights_bytes = ((w1b.size + w2b.size + w3b.size) * 2
                     + (b1p.size + b2p.size + b3p.size) * 4)
    act_bytes = TB * in_pad * 2 + TB * OUT_PAD * 2           # x / out tiles (bf16)
    inter_bytes = TB * HIDDEN_PAD * 4 * 2 + TB * OUT_PAD * 4 * 2  # f32 intermediates
    vmem_limit = int(max(32 << 20,
                         min(2 * (weights_bytes + act_bytes + inter_bytes) + (4 << 20),
                             48 << 20)))

    out = pl.pallas_call(
        mlp_kernel,
        out_shape=jax.ShapeDtypeStruct((B_pad, OUT_PAD), jnp.bfloat16),
        grid_spec=pltpu.PrefetchScalarGridSpec(
            num_scalar_prefetch=0,
            grid=grid,
            in_specs=[
                pl.BlockSpec((TB, in_pad), lambda i: (i, 0)),          # x tile
                pl.BlockSpec((in_pad, HIDDEN_PAD), lambda i: (0, 0)),  # W1 (resident)
                pl.BlockSpec((1, HIDDEN_PAD), lambda i: (0, 0)),       # b1
                pl.BlockSpec((HIDDEN_PAD, HIDDEN_PAD), lambda i: (0, 0)),  # W2
                pl.BlockSpec((1, HIDDEN_PAD), lambda i: (0, 0)),       # b2
                pl.BlockSpec((HIDDEN_PAD, OUT_PAD), lambda i: (0, 0)), # W3
                pl.BlockSpec((1, OUT_PAD), lambda i: (0, 0)),          # b3
            ],
            out_specs=pl.BlockSpec((TB, OUT_PAD), lambda i: (i, 0)),
        ),
        compiler_params=pltpu.CompilerParams(
            dimension_semantics=("parallel",),
            vmem_limit_bytes=vmem_limit),
        cost_estimate=cost,
    )(x_bf, w1b, b1p, w2b, b2p, w3b, b3p)

    # strip batch / class padding, upcast bf16 probabilities to f32 for callers
    return out[:B, :CLASSES].astype(jnp.float32)


def reference_forward(params, x_cat, x_cont=None):
    """Pure-JAX f32 reference mirroring the PyTorch eval-mode forward."""
    embs = [tbl[x_cat[:, i]] for i, tbl in enumerate(params["emb_tables"])]
    x = jnp.concatenate(embs, axis=1)
    if params["no_of_cont"]:
        gc, bc, mc, vc = params["bn_cont"]
        xc = (x_cont - mc) * jax.lax.rsqrt(vc + EPS) * gc + bc
        x = jnp.concatenate([x, xc], axis=1)
    w1, b1 = params["fc1"]; g1, be1, m1, v1 = params["bn1"]
    w2, b2 = params["fc2"]; g2, be2, m2, v2 = params["bn2"]
    w3, b3 = params["fc3"]
    h = x @ w1 + b1
    h = (h - m1) * jax.lax.rsqrt(v1 + EPS) * g1 + be1
    h = jnp.maximum(h, 0.0)
    h = h @ w2 + b2
    h = (h - m2) * jax.lax.rsqrt(v2 + EPS) * g2 + be2
    h = jnp.maximum(h, 0.0)
    logits = h @ w3 + b3
    return jax.nn.softmax(logits, axis=-1)


if __name__ == "__main__":
    key = jax.random.PRNGKey(0)
    k_params, k_cat, k_cont = jax.random.split(key, 3)

    # small synthetic config: 3 categorical columns + 4 continuous features
    emb_dims = [(10, 8), (7, 4), (5, 4)]   # no_of_embs = 16
    no_of_cont = 4
    batch = 8

    params = make_params(k_params, emb_dims, no_of_cont)

    x_cat = jnp.stack(
        [jax.random.randint(jax.random.fold_in(k_cat, i), (batch,), 0, n)
         for i, (n, _) in enumerate(emb_dims)], axis=1).astype(jnp.int32)
    x_cont = jax.random.normal(k_cont, (batch, no_of_cont), jnp.float32)

    out = classification_embd_nn(params, x_cat, x_cont)
    out = jax.block_until_ready(out)

    ref = reference_forward(params, x_cat, x_cont)
    assert out.shape == (batch, CLASSES)
    # relaxed tolerances: bf16 matmuls + bf16 output + approx reciprocal vs f32 ref
    assert jnp.allclose(jnp.sum(out, axis=-1), 1.0, atol=1e-2)
    assert jnp.allclose(out, ref, atol=1e-2, rtol=5e-2)

    print("KERNEL_OK")
</pallas_src>

<mosaic_0001>
module attributes {stable_mosaic.version = 11 : i64} {
  func.func @mlp_kernel(%arg0: i32, %arg1: memref<16x128xbf16, #tpu.memory_space<vmem>>, %arg2: memref<128x256xbf16, #tpu.memory_space<vmem>>, %arg3: memref<1x256xf32, #tpu.memory_space<vmem>>, %arg4: memref<256x256xbf16, #tpu.memory_space<vmem>>, %arg5: memref<1x256xf32, #tpu.memory_space<vmem>>, %arg6: memref<256x128xbf16, #tpu.memory_space<vmem>>, %arg7: memref<1x128xf32, #tpu.memory_space<vmem>>, %arg8: memref<16x128xbf16, #tpu.memory_space<vmem>>) attributes {dimension_semantics = [#tpu.dimension_semantics<parallel>], iteration_bounds = array<i64: 1>, scalar_prefetch = 0 : i64, scratch_operands = 0 : i64, tpu.core_type = #tpu.core_type<tc>, window_params = [{transform_indices = @transform_0, window_bounds = array<i64: 16, 128>}, {pipeline_mode = #tpu.pipeline_mode<synchronous>, transform_indices = @transform_1, window_bounds = array<i64: 128, 256>}, {pipeline_mode = #tpu.pipeline_mode<synchronous>, transform_indices = @transform_2, window_bounds = array<i64: 1, 256>}, {pipeline_mode = #tpu.pipeline_mode<synchronous>, transform_indices = @transform_3, window_bounds = array<i64: 256, 256>}, {pipeline_mode = #tpu.pipeline_mode<synchronous>, transform_indices = @transform_4, window_bounds = array<i64: 1, 256>}, {pipeline_mode = #tpu.pipeline_mode<synchronous>, transform_indices = @transform_5, window_bounds = array<i64: 256, 128>}, {pipeline_mode = #tpu.pipeline_mode<synchronous>, transform_indices = @transform_6, window_bounds = array<i64: 1, 128>}, {transform_indices = @transform_7, window_bounds = array<i64: 16, 128>}]} {
    %c0 = arith.constant 0 : index
    %c0_0 = arith.constant 0 : index
    %0 = vector.load %arg1[%c0, %c0_0] : memref<16x128xbf16, #tpu.memory_space<vmem>>, vector<16x128xbf16>
    %c0_1 = arith.constant 0 : index
    %c0_2 = arith.constant 0 : index
    %1 = vector.load %arg2[%c0_1, %c0_2] : memref<128x256xbf16, #tpu.memory_space<vmem>>, vector<128x256xbf16>
    %cst = arith.constant dense<0.000000e+00> : vector<16x256xf32>
    %2 = tpu.matmul %0, %1, %cst {dimension_numbers = #tpu.dot_dimension_numbers<[1], [0], [0], [1], [0, 0, 1, 1], [], []>} : vector<16x128xbf16>, vector<128x256xbf16>, vector<16x256xf32> -> vector<16x256xf32>
    %c0_3 = arith.constant 0 : index
    %c0_4 = arith.constant 0 : index
    %3 = vector.load %arg3[%c0_3, %c0_4] : memref<1x256xf32, #tpu.memory_space<vmem>>, vector<1x256xf32>
    %4 = vector.broadcast %3 : vector<1x256xf32> to vector<16x256xf32>
    %5 = arith.addf %2, %4 : vector<16x256xf32>
    %cst_5 = arith.constant 0.000000e+00 : f32
    %6 = vector.broadcast %cst_5 : f32 to vector<16x256xf32>
    %7 = arith.maximumf %5, %6 : vector<16x256xf32>
    %8 = arith.truncf %7 : vector<16x256xf32> to vector<16x256xbf16>
    %c0_6 = arith.constant 0 : index
    %c0_7 = arith.constant 0 : index
    %9 = vector.load %arg4[%c0_6, %c0_7] : memref<256x256xbf16, #tpu.memory_space<vmem>>, vector<256x256xbf16>
    %cst_8 = arith.constant dense<0.000000e+00> : vector<16x256xf32>
    %10 = tpu.matmul %8, %9, %cst_8 {dimension_numbers = #tpu.dot_dimension_numbers<[1], [0], [0], [1], [0, 0, 1, 1], [], []>} : vector<16x256xbf16>, vector<256x256xbf16>, vector<16x256xf32> -> vector<16x256xf32>
    %c0_9 = arith.constant 0 : index
    %c0_10 = arith.constant 0 : index
    %11 = vector.load %arg5[%c0_9, %c0_10] : memref<1x256xf32, #tpu.memory_space<vmem>>, vector<1x256xf32>
    %12 = vector.broadcast %11 : vector<1x256xf32> to vector<16x256xf32>
    %13 = arith.addf %10, %12 : vector<16x256xf32>
    %cst_11 = arith.constant 0.000000e+00 : f32
    %14 = vector.broadcast %cst_11 : f32 to vector<16x256xf32>
    %15 = arith.maximumf %13, %14 : vector<16x256xf32>
    %16 = arith.truncf %15 : vector<16x256xf32> to vector<16x256xbf16>
    %c0_12 = arith.constant 0 : index
    %c0_13 = arith.constant 0 : index
    %17 = vector.load %arg6[%c0_12, %c0_13] : memref<256x128xbf16, #tpu.memory_space<vmem>>, vector<256x128xbf16>
    %cst_14 = arith.constant dense<0.000000e+00> : vector<16x128xf32>
    %18 = tpu.matmul %16, %17, %cst_14 {dimension_numbers = #tpu.dot_dimension_numbers<[1], [0], [0], [1], [0, 0, 1, 1], [], []>} : vector<16x256xbf16>, vector<256x128xbf16>, vector<16x128xf32> -> vector<16x128xf32>
    %c0_15 = arith.constant 0 : index
    %c0_16 = arith.constant 0 : index
    %19 = vector.load %arg7[%c0_15, %c0_16] : memref<1x128xf32, #tpu.memory_space<vmem>>, vector<1x128xf32>
    %20 = vector.broadcast %19 : vector<1x128xf32> to vector<16x128xf32>
    %21 = arith.addf %18, %20 : vector<16x128xf32>
    %cst_17 = arith.constant dense<0xFF800000> : vector<16xf32>
    %22 = vector.multi_reduction <maximumf>, %21, %cst_17 [1] : vector<16x128xf32> to vector<16xf32>
    %23 = vector.shape_cast %22 : vector<16xf32> to vector<16x1xf32>
    %24 = vector.broadcast %23 : vector<16x1xf32> to vector<16x128xf32>
    %25 = arith.subf %21, %24 : vector<16x128xf32>
    %26 = math.exp %25 : vector<16x128xf32>
    %cst_18 = arith.constant dense<0.000000e+00> : vector<16xf32>
    %27 = vector.multi_reduction <add>, %26, %cst_18 [1] : vector<16x128xf32> to vector<16xf32>
    %28 = vector.shape_cast %27 : vector<16xf32> to vector<16x1xf32>
    %29 = tpu.reciprocal %28 {approx = true} : vector<16x1xf32> -> vector<16x1xf32>
    %30 = vector.broadcast %29 : vector<16x1xf32> to vector<16x128xf32>
    %31 = arith.mulf %26, %30 : vector<16x128xf32>
    %32 = arith.truncf %31 : vector<16x128xf32> to vector<16x128xbf16>
    %c0_19 = arith.constant 0 : index
    %c0_20 = arith.constant 0 : index
    %33 = vector.load %arg8[%c0_19, %c0_20] : memref<16x128xbf16, #tpu.memory_space<vmem>>, vector<16x128xbf16>
    tpu.vector_store %arg8[%c0_19, %c0_20], %32 {strides = array<i32>} : memref<16x128xbf16, #tpu.memory_space<vmem>>, vector<16x128xbf16>,
    return
  }
  func.func @transform_0(%arg0: i32) -> (i32, i32) {
    %c0_i32 = arith.constant 0 : i32
    %c0_i32_0 = arith.constant 0 : i32
    return %arg0, %c0_i32 : i32, i32
  }
  func.func @transform_1(%arg0: i32) -> (i32, i32) {
    %c0_i32 = arith.constant 0 : i32
    %c0_i32_0 = arith.constant 0 : i32
    %c0_i32_1 = arith.constant 0 : i32
    return %c0_i32, %c0_i32_0 : i32, i32
  }
  func.func @transform_2(%arg0: i32) -> (i32, i32) {
    %c0_i32 = arith.constant 0 : i32
    %c0_i32_0 = arith.constant 0 : i32
    %c0_i32_1 = arith.constant 0 : i32
    return %c0_i32, %c0_i32_0 : i32, i32
  }
  func.func @transform_3(%arg0: i32) -> (i32, i32) {
    %c0_i32 = arith.constant 0 : i32
    %c0_i32_0 = arith.constant 0 : i32
    %c0_i32_1 = arith.constant 0 : i32
    return %c0_i32, %c0_i32_0 : i32, i32
  }
  func.func @transform_4(%arg0: i32) -> (i32, i32) {
    %c0_i32 = arith.constant 0 : i32
    %c0_i32_0 = arith.constant 0 : i32
    %c0_i32_1 = arith.constant 0 : i32
    return %c0_i32, %c0_i32_0 : i32, i32
  }
  func.func @transform_5(%arg0: i32) -> (i32, i32) {
    %c0_i32 = arith.constant 0 : i32
    %c0_i32_0 = arith.constant 0 : i32
    %c0_i32_1 = arith.constant 0 : i32
    return %c0_i32, %c0_i32_0 : i32, i32
  }
  func.func @transform_6(%arg0: i32) -> (i32, i32) {
    %c0_i32 = arith.constant 0 : i32
    %c0_i32_0 = arith.constant 0 : i32
    %c0_i32_1 = arith.constant 0 : i32
    return %c0_i32, %c0_i32_0 : i32, i32
  }
  func.func @transform_7(%arg0: i32) -> (i32, i32) {
    %c0_i32 = arith.constant 0 : i32
    %c0_i32_0 = arith.constant 0 : i32
    return %arg0, %c0_i32 : i32, i32
  }
}

</mosaic_0001>

<llo_original>
// kernel: tpu_custom_call.1
$region0: #{tpu_custom_call.1}
  #allocation0 [shape = 'u32[]', space=smem, size = 0x4, offset = 0x4, fixed_abs, tag = 'smem constant byte address 0x4 - core index']
  #allocation1 [shape = 'u32[144,128]{1,0:T(1,128)}', space=vmem, size = 0x12000, scoped, tag = 'internal scratch']
  %s0 = inlined_call_operand.hbm [shape: bf16[16,128], index: 0, kind: input, shape index: {}]
  %s1 = inlined_call_operand.hbm [shape: bf16[128,256], index: 1, kind: input, shape index: {}]
  %s2 = inlined_call_operand.vmem [shape: f32[1,256], index: 2, kind: input, shape index: {}]
  %s3 = inlined_call_operand.hbm [shape: bf16[256,256], index: 3, kind: input, shape index: {}]
  %s4 = inlined_call_operand.vmem [shape: f32[1,256], index: 4, kind: input, shape index: {}]
  %s5 = inlined_call_operand.hbm [shape: bf16[256,128], index: 5, kind: input, shape index: {}]
  %s6 = inlined_call_operand.vmem [shape: f32[1,128], index: 6, kind: input, shape index: {}]
  %s7 = inlined_call_operand.hbm [shape: bf16[16,128], index: 7, kind: output, shape index: {}]
  %s8 = sld [smem:[#allocation0]]
  $region54: #{tpu_custom_call.1} parent=0
    _
  %s10 = ssub.s32 1, %s8
  %s11 = scalar_select 0, %s10, %s8
  $region1: #{tpu_custom_call.1} parent=0
    #allocation2 [shape = 'u8[4096]{0}', space=vmem, size = 0x1000, scoped, tag = 'input window, operand 0, single buffered']
    #allocation3 [shape = 's32[1]{0}', space=sflag, size = 0x4, scoped, tag = 'scoped memory for tpu_custom_call.1']
    #allocation4 [shape = 's32[1]{0}', space=sflag, size = 0x4, scoped, tag = 'scoped memory for tpu_custom_call.1']
    #allocation5 [shape = 'u8[65536]{0}', space=vmem, size = 0x10000, scoped, tag = 'input window, operand 1, single buffered']
    #allocation6 [shape = 's32[1]{0}', space=sflag, size = 0x4, scoped, tag = 'scoped memory for tpu_custom_call.1']
    #allocation7 [shape = 'u8[131072]{0}', space=vmem, size = 0x20000, scoped, tag = 'input window, operand 3, single buffered']
    #allocation8 [shape = 'u8[65536]{0}', space=vmem, size = 0x10000, scoped, tag = 'input window, operand 5, single buffered']
    #allocation9 [shape = 's32[1]{0}', space=sflag, size = 0x4, scoped, tag = 'scoped memory for tpu_custom_call.1']
    #allocation10 [shape = 'u8[4096]{0}', space=vmem, size = 0x1000, scoped, tag = 'output window, operand 0, single buffered']
    %12 = vsyncpa [#allocation3], 0
    %13 = vsyncpa [#allocation6], 0
    %14 = vsyncpa [#allocation9], 0
    %15 = vsyncpa [#allocation4], 0
    // Predicated region
    $region2: #{tpu_custom_call.1} parent=1 // pred_check
      _
    $region3: #{tpu_custom_call.1} parent=1 // pred_check_branch
      %17 = sbr.rel (0) target = $region5
    $region4: #{tpu_custom_call.1} parent=1 // pred_region
      %s19 = ssub.s32 128, 128
      %20 = vsyncadd [#allocation3], %s19
      %s21 = sshll.u32 [#allocation2], 4
      %s22 = int_to_ptr.vmem [resolvable:$true] %s21
      %27 = dma.hbm_to_vmem [thread:$0]  %s0, 128, %s22, [#allocation3], 64, 64, 4
    $region5: #{tpu_custom_call.1} parent=1 // pred_fallthru
      _
    // Predicated region
    $region6: #{tpu_custom_call.1} parent=1 // pred_check
      _
    $region7: #{tpu_custom_call.1} parent=1 // pred_check_branch
      %29 = sbr.rel (0) target = $region9
    $region8: #{tpu_custom_call.1} parent=1 // pred_region
      %s31 = ssub.s32 2048, 2048
      %32 = vsyncadd [#allocation6], %s31
      %s33 = sshll.u32 [#allocation5], 4
      %s34 = int_to_ptr.vmem [resolvable:$true] %s33
      %39 = dma.hbm_to_vmem [thread:$0]  %s1, 2048, %s34, [#allocation6], 128, 128, 8
    $region9: #{tpu_custom_call.1} parent=1 // pred_fallthru
      _
    // Predicated region
    $region10: #{tpu_custom_call.1} parent=1 // pred_check
      _
    $region11: #{tpu_custom_call.1} parent=1 // pred_check_branch
      %41 = sbr.rel (0) target = $region13
    $region12: #{tpu_custom_call.1} parent=1 // pred_region
      _
    $region13: #{tpu_custom_call.1} parent=1 // pred_fallthru
      _
    // Predicated region
    $region14: #{tpu_custom_call.1} parent=1 // pred_check
      _
    $region15: #{tpu_custom_call.1} parent=1 // pred_check_branch
      %43 = sbr.rel (0) target = $region17
    $region16: #{tpu_custom_call.1} parent=1 // pred_region
      %s45 = ssub.s32 4096, 4096
      %46 = vsyncadd [#allocation6], %s45
      %s47 = sshll.u32 [#allocation7], 4
      %s48 = int_to_ptr.vmem [resolvable:$true] %s47
      %53 = dma.hbm_to_vmem [thread:$0]  %s3, 4096, %s48, [#allocation6], 128, 128, 8
    $region17: #{tpu_custom_call.1} parent=1 // pred_fallthru
      _
    // Predicated region
    $region18: #{tpu_custom_call.1} parent=1 // pred_check
      _
    $region19: #{tpu_custom_call.1} parent=1 // pred_check_branch
      %55 = sbr.rel (0) target = $region21
    $region20: #{tpu_custom_call.1} parent=1 // pred_region
      _
    $region21: #{tpu_custom_call.1} parent=1 // pred_fallthru
      _
    // Predicated region
    $region22: #{tpu_custom_call.1} parent=1 // pred_check
      _
    $region23: #{tpu_custom_call.1} parent=1 // pred_check_branch
      %57 = sbr.rel (0) target = $region25
    $region24: #{tpu_custom_call.1} parent=1 // pred_region
      %s59 = ssub.s32 2048, 2048
      %60 = vsyncadd [#allocation9], %s59
      %s61 = sshll.u32 [#allocation8], 4
      %s62 = int_to_ptr.vmem [resolvable:$true] %s61
      %67 = dma.hbm_to_vmem [thread:$0]  %s5, 2048, %s62, [#allocation9], 64, 64, 4
    $region25: #{tpu_custom_call.1} parent=1 // pred_fallthru
      _
    // Predicated region
    $region26: #{tpu_custom_call.1} parent=1 // pred_check
      _
    $region27: #{tpu_custom_call.1} parent=1 // pred_check_branch
      %69 = sbr.rel (0) target = $region29
    $region28: #{tpu_custom_call.1} parent=1 // pred_region
      _
    $region29: #{tpu_custom_call.1} parent=1 // pred_fallthru
      _
    // Predicated region
    $region30: #{tpu_custom_call.1} parent=1 // pred_check
      _
    $region31: #{tpu_custom_call.1} parent=1 // pred_check_branch
      %71 = sbr.rel (0) target = $region33
    $region32: #{tpu_custom_call.1} parent=1 // pred_region
      %72 = dma.done [#allocation3], 128
    $region33: #{tpu_custom_call.1} parent=1 // pred_fallthru
      _
    // Predicated region
    $region34: #{tpu_custom_call.1} parent=1 // pred_check
      _
    $region35: #{tpu_custom_call.1} parent=1 // pred_check_branch
      %74 = sbr.rel (0) target = $region37
    $region36: #{tpu_custom_call.1} parent=1 // pred_region
      %75 = dma.done [#allocation6], 2048
    $region37: #{tpu_custom_call.1} parent=1 // pred_fallthru
      _
    // Predicated region
    $region38: #{tpu_custom_call.1} parent=1 // pred_check
      _
    $region39: #{tpu_custom_call.1} parent=1 // pred_check_branch
      %77 = sbr.rel (0) target = $region41
    $region40: #{tpu_custom_call.1} parent=1 // pred_region
      %78 = dma.done [#allocation6], 4096
    $region41: #{tpu_custom_call.1} parent=1 // pred_fallthru
      _
    // Predicated region
    $region42: #{tpu_custom_call.1} parent=1 // pred_check
      _
    $region43: #{tpu_custom_call.1} parent=1 // pred_check_branch
      %80 = sbr.rel (0) target = $region45
    $region44: #{tpu_custom_call.1} parent=1 // pred_region
      %81 = dma.done [#allocation9], 2048
    $region45: #{tpu_custom_call.1} parent=1 // pred_fallthru
      _
    %v83 = vld [vmem:[#allocation2] sm:$0xf]
    %v84 = vld [vmem:[#allocation2 + $0x4] sm:$0xf]
    %v85 = vld [vmem:[#allocation5] sm:$0xff]
    %v86 = vld [vmem:[#allocation5 + $0x8] sm:$0xff]
    %v87 = vld [vmem:[#allocation5 + $0x10] sm:$0xff]
    %v88 = vld [vmem:[#allocation5 + $0x18] sm:$0xff]
    %v89 = vld [vmem:[#allocation5 + $0x20] sm:$0xff]
    %v90 = vld [vmem:[#allocation5 + $0x28] sm:$0xff]
    %v91 = vld [vmem:[#allocation5 + $0x30] sm:$0xff]
    %v92 = vld [vmem:[#allocation5 + $0x38] sm:$0xff]
    %v93 = vld [vmem:[#allocation5 + $0x40] sm:$0xff]
    %v94 = vld [vmem:[#allocation5 + $0x48] sm:$0xff]
    %v95 = vld [vmem:[#allocation5 + $0x50] sm:$0xff]
    %v96 = vld [vmem:[#allocation5 + $0x58] sm:$0xff]
    %v97 = vld [vmem:[#allocation5 + $0x60] sm:$0xff]
    %v98 = vld [vmem:[#allocation5 + $0x68] sm:$0xff]
    %v99 = vld [vmem:[#allocation5 + $0x70] sm:$0xff]
    %v100 = vld [vmem:[#allocation5 + $0x78] sm:$0xff]
    %v101 = vld [vmem:[%s2] sm:$0x3]
    %v103 = vlaneseq
    %v104 = vshrl.u32 %v103, 7
    %v105 = vsub.s32 0, %v104
    %v106 = vrot.slane %v101, %v105
    %v107 = vlaneseq
    %v108 = vshrl.u32 %v107, 7
    %v109 = vsub.s32 1, %v108
    %v110 = vrot.slane %v101, %v109
    %v115 = vunpack.c.l.b16 %v83
    %v116 = vunpack.c.l.b16 %v84
    %v117 = vpack.c.b16 %v116, %v115
    %v135 = vunpack.c.l.b16 %v85
    %v136 = vunpack.c.h.b16 %v85
    %v137 = vunpack.c.l.b16 %v86
    %v138 = vunpack.c.h.b16 %v86
    %v139 = vunpack.c.l.b16 %v87
    %v140 = vunpack.c.h.b16 %v87
    %v141 = vunpack.c.l.b16 %v88
    %v142 = vunpack.c.h.b16 %v88
    %v143 = vunpack.c.l.b16 %v89
    %v144 = vunpack.c.h.b16 %v89
    %v145 = vunpack.c.l.b16 %v90
    %v146 = vunpack.c.h.b16 %v90
    %v147 = vunpack.c.l.b16 %v91
    %v148 = vunpack.c.h.b16 %v91
    %v149 = vunpack.c.l.b16 %v92
    %v150 = vunpack.c.h.b16 %v92
    %v151 = vunpack.c.l.b16 %v93
    %v152 = vunpack.c.h.b16 %v93
    %v153 = vunpack.c.l.b16 %v94
    %v154 = vunpack.c.h.b16 %v94
    %v155 = vunpack.c.l.b16 %v95
    %v156 = vunpack.c.h.b16 %v95
    %v157 = vunpack.c.l.b16 %v96
    %v158 = vunpack.c.h.b16 %v96
    %v159 = vunpack.c.l.b16 %v97
    %v160 = vunpack.c.h.b16 %v97
    %v161 = vunpack.c.l.b16 %v98
    %v162 = vunpack.c.h.b16 %v98
    %v163 = vunpack.c.l.b16 %v99
    %v164 = vunpack.c.h.b16 %v99
    %v165 = vunpack.c.l.b16 %v100
    %v166 = vunpack.c.h.b16 %v100
    %v167 = vpack.c.b16 %v137, %v135
    %v168 = vpack.c.b16 %v138, %v136
    %v169 = vpack.c.b16 %v141, %v139
    %v170 = vpack.c.b16 %v142, %v140
    %v171 = vpack.c.b16 %v145, %v143
    %v172 = vpack.c.b16 %v146, %v144
    %v173 = vpack.c.b16 %v149, %v147
    %v174 = vpack.c.b16 %v150, %v148
    %v175 = vpack.c.b16 %v153, %v151
    %v176 = vpack.c.b16 %v154, %v152
    %v177 = vpack.c.b16 %v157, %v155
    %v178 = vpack.c.b16 %v158, %v156
    %v179 = vpack.c.b16 %v161, %v159
    %v180 = vpack.c.b16 %v162, %v160
    %v181 = vpack.c.b16 %v165, %v163
    %v182 = vpack.c.b16 %v166, %v164
    %199 = vmatprep.subr.bf16.mxu0 %v182
    %200 = vmatpush1.bf16.msra.mxu0 %v181
    %201 = vmatprep.subr.bf16.mxu0 %v180
    %202 = vmatpush1.bf16.msra.mxu0 %v179
    %203 = vmatprep.subr.bf16.mxu0 %v178
    %204 = vmatpush1.bf16.msra.mxu0 %v177
    %205 = vmatprep.subr.bf16.mxu0 %v176
    %206 = vmatpush1.bf16.msra.mxu0 %v175
    %207 = vmatprep.subr.bf16.mxu0 %v174
    %208 = vmatpush1.bf16.msra.mxu0 %v173
    %209 = vmatprep.subr.bf16.mxu0 %v172
    %210 = vmatpush1.bf16.msra.mxu0 %v171
    %211 = vmatprep.subr.bf16.mxu0 %v170
    %212 = vmatpush1.bf16.msra.mxu0 %v169
    %213 = vmatprep.subr.bf16.mxu0 %v168
    %214 = vmatpush1.bf16.msra.mxu0 %v167
    %215 = vmatprep.subr.bf16.mxu0 0
    %216 = vmatpush2.bf16.msra.mxu0 0
    %217 = vmatprep.subr.bf16.mxu0 0
    %218 = vmatpush2.bf16.msra.mxu0 0
    %219 = vmatprep.subr.bf16.mxu0 0
    %220 = vmatpush2.bf16.msra.mxu0 0
    %221 = vmatprep.subr.bf16.mxu0 0
    %222 = vmatpush2.bf16.msra.mxu0 0
    %223 = vmatprep.subr.bf16.mxu0 0
    %224 = vmatpush2.bf16.msra.mxu0 0
    %225 = vmatprep.subr.bf16.mxu0 0
    %226 = vmatpush2.bf16.msra.mxu0 0
    %227 = vmatprep.subr.bf16.mxu0 0
    %228 = vmatpush2.bf16.msra.mxu0 0
    %229 = vmatprep.subr.bf16.mxu0 0
    %230 = vmatpush2.bf16.msra.mxu0 0
    %231 = vmatprep.mubr.bf16.mxu0 0
    %232 = vmatmul.mubr.bf16.gmra.mxu0 %v117
    %v233 = vpop.f32.mrf.mxu0
    %v234 = vadd.f32 %v106, %v233
    %v235 = vpop.f32.mrf.mxu0
    %v236 = vadd.f32 %v110, %v235
    %v237 = vpop.f32.mrf.mxu0
    %v238 = vadd.f32 %v106, %v237
    %v239 = vpop.f32.mrf.mxu0
    %v240 = vadd.f32 %v110, %v239
    %241 = vdwg.mxu0
    %v242 = vmax.f32 %v234, 0.0
    %v243 = vmax.f32 %v236, 0.0
    %v244 = vmax.f32 %v238, 0.0
    %v245 = vmax.f32 %v240, 0.0
    %v246 = vpack.c.bf16 %v244, %v242
    %v247 = vpack.c.bf16 %v245, %v243
    %v248 = vld [vmem:[#allocation7] sm:$0xff]
    %v249 = vld [vmem:[#allocation7 + $0x8] sm:$0xff]
    %v250 = vld [vmem:[#allocation7 + $0x10] sm:$0xff]
    %v251 = vld [vmem:[#allocation7 + $0x18] sm:$0xff]
    %v252 = vld [vmem:[#allocation7 + $0x20] sm:$0xff]
    %v253 = vld [vmem:[#allocation7 + $0x28] sm:$0xff]
    %v254 = vld [vmem:[#allocation7 + $0x30] sm:$0xff]
    %v255 = vld [vmem:[#allocation7 + $0x38] sm:$0xff]
    %v256 = vld [vmem:[#allocation7 + $0x40] sm:$0xff]
    %v257 = vld [vmem:[#allocation7 + $0x48] sm:$0xff]
    %v258 = vld [vmem:[#allocation7 + $0x50] sm:$0xff]
    %v259 = vld [vmem:[#allocation7 + $0x58] sm:$0xff]
    %v260 = vld [vmem:[#allocation7 + $0x60] sm:$0xff]
    %v261 = vld [vmem:[#allocation7 + $0x68] sm:$0xff]
    %v262 = vld [vmem:[#allocation7 + $0x70] sm:$0xff]
    %v263 = vld [vmem:[#allocation7 + $0x78] sm:$0xff]
    %v264 = vld [vmem:[#allocation7 + $0x80] sm:$0xff]
    %v265 = vld [vmem:[#allocation7 + $0x88] sm:$0xff]
    %v266 = vld [vmem:[#allocation7 + $0x90] sm:$0xff]
    %v267 = vld [vmem:[#allocation7 + $0x98] sm:$0xff]
    %v268 = vld [vmem:[#allocation7 + $0xa0] sm:$0xff]
    %v269 = vld [vmem:[#allocation7 + $0xa8] sm:$0xff]
    %v270 = vld [vmem:[#allocation7 + $0xb0] sm:$0xff]
    %v271 = vld [vmem:[#allocation7 + $0xb8] sm:$0xff]
    %v272 = vld [vmem:[#allocation7 + $0xc0] sm:$0xff]
    %v273 = vld [vmem:[#allocation7 + $0xc8] sm:$0xff]
    %v274 = vld [vmem:[#allocation7 + $0xd0] sm:$0xff]
    %v275 = vld [vmem:[#allocation7 + $0xd8] sm:$0xff]
    %v276 = vld [vmem:[#allocation7 + $0xe0] sm:$0xff]
    %v277 = vld [vmem:[#allocation7 + $0xe8] sm:$0xff]
    %v278 = vld [vmem:[#allocation7 + $0xf0] sm:$0xff]
    %v279 = vld [vmem:[#allocation7 + $0xf8] sm:$0xff]
    %v280 = vld [vmem:[%s4] sm:$0x3]
    %v282 = vlaneseq
    %v283 = vshrl.u32 %v282, 7
    %v284 = vsub.s32 0, %v283
    %v285 = vrot.slane %v280, %v284
    %v286 = vlaneseq
    %v287 = vshrl.u32 %v286, 7
    %v288 = vsub.s32 1, %v287
    %v289 = vrot.slane %v280, %v288
    %v324 = vunpack.c.l.b16 %v248
    %v325 = vunpack.c.h.b16 %v248
    %v326 = vunpack.c.l.b16 %v249
    %v327 = vunpack.c.h.b16 %v249
    %v328 = vunpack.c.l.b16 %v250
    %v329 = vunpack.c.h.b16 %v250
    %v330 = vunpack.c.l.b16 %v251
    %v331 = vunpack.c.h.b16 %v251
    %v332 = vunpack.c.l.b16 %v252
    %v333 = vunpack.c.h.b16 %v252
    %v334 = vunpack.c.l.b16 %v253
    %v335 = vunpack.c.h.b16 %v253
    %v336 = vunpack.c.l.b16 %v254
    %v337 = vunpack.c.h.b16 %v254
    %v338 = vunpack.c.l.b16 %v255
    %v339 = vunpack.c.h.b16 %v255
    %v340 = vunpack.c.l.b16 %v256
    %v341 = vunpack.c.h.b16 %v256
    %v342 = vunpack.c.l.b16 %v257
    %v343 = vunpack.c.h.b16 %v257
    %v344 = vunpack.c.l.b16 %v258
    %v345 = vunpack.c.h.b16 %v258
    %v346 = vunpack.c.l.b16 %v259
    %v347 = vunpack.c.h.b16 %v259
    %v348 = vunpack.c.l.b16 %v260
    %v349 = vunpack.c.h.b16 %v260
    %v350 = vunpack.c.l.b16 %v261
    %v351 = vunpack.c.h.b16 %v261
    %v352 = vunpack.c.l.b16 %v262
    %v353 = vunpack.c.h.b16 %v262
    %v354 = vunpack.c.l.b16 %v263
    %v355 = vunpack.c.h.b16 %v263
    %v356 = vunpack.c.l.b16 %v264
    %v357 = vunpack.c.h.b16 %v264
    %v358 = vunpack.c.l.b16 %v265
    %v359 = vunpack.c.h.b16 %v265
    %v360 = vunpack.c.l.b16 %v266
    %v361 = vunpack.c.h.b16 %v266
    %v362 = vunpack.c.l.b16 %v267
    %v363 = vunpack.c.h.b16 %v267
    %v364 = vunpack.c.l.b16 %v268
    %v365 = vunpack.c.h.b16 %v268
    %v366 = vunpack.c.l.b16 %v269
    %v367 = vunpack.c.h.b16 %v269
    %v368 = vunpack.c.l.b16 %v270
    %v369 = vunpack.c.h.b16 %v270
    %v370 = vunpack.c.l.b16 %v271
    %v371 = vunpack.c.h.b16 %v271
    %v372 = vunpack.c.l.b16 %v272
    %v373 = vunpack.c.h.b16 %v272
    %v374 = vunpack.c.l.b16 %v273
    %v375 = vunpack.c.h.b16 %v273
    %v376 = vunpack.c.l.b16 %v274
    %v377 = vunpack.c.h.b16 %v274
    %v378 = vunpack.c.l.b16 %v275
    %v379 = vunpack.c.h.b16 %v275
    %v380 = vunpack.c.l.b16 %v276
    %v381 = vunpack.c.h.b16 %v276
    %v382 = vunpack.c.l.b16 %v277
    %v383 = vunpack.c.h.b16 %v277
    %v384 = vunpack.c.l.b16 %v278
    %v385 = vunpack.c.h.b16 %v278
    %v386 = vunpack.c.l.b16 %v279
    %v387 = vunpack.c.h.b16 %v279
    %v388 = vpack.c.b16 %v326, %v324
    %v389 = vpack.c.b16 %v327, %v325
    %v390 = vpack.c.b16 %v330, %v328
    %v391 = vpack.c.b16 %v331, %v329
    %v392 = vpack.c.b16 %v334, %v332
    %v393 = vpack.c.b16 %v335, %v333
    %v394 = vpack.c.b16 %v338, %v336
    %v395 = vpack.c.b16 %v339, %v337
    %v396 = vpack.c.b16 %v342, %v340
    %v397 = vpack.c.b16 %v343, %v341
    %v398 = vpack.c.b16 %v346, %v344
    %v399 = vpack.c.b16 %v347, %v345
    %v400 = vpack.c.b16 %v350, %v348
    %v401 = vpack.c.b16 %v351, %v349
    %v402 = vpack.c.b16 %v354, %v352
    %v403 = vpack.c.b16 %v355, %v353
    %v404 = vpack.c.b16 %v358, %v356
    %v405 = vpack.c.b16 %v359, %v357
    %v406 = vpack.c.b16 %v362, %v360
    %v407 = vpack.c.b16 %v363, %v361
    %v408 = vpack.c.b16 %v366, %v364
    %v409 = vpack.c.b16 %v367, %v365
    %v410 = vpack.c.b16 %v370, %v368
    %v411 = vpack.c.b16 %v371, %v369
    %v412 = vpack.c.b16 %v374, %v372
    %v413 = vpack.c.b16 %v375, %v373
    %v414 = vpack.c.b16 %v378, %v376
    %v415 = vpack.c.b16 %v379, %v377
    %v416 = vpack.c.b16 %v382, %v380
    %v417 = vpack.c.b16 %v383, %v381
    %v418 = vpack.c.b16 %v386, %v384
    %v419 = vpack.c.b16 %v387, %v385
    %452 = vmatprep.subr.bf16.mxu0 %v403
    %453 = vmatpush1.bf16.msra.mxu0 %v402
    %454 = vmatprep.subr.bf16.mxu0 %v401
    %455 = vmatpush1.bf16.msra.mxu0 %v400
    %456 = vmatprep.subr.bf16.mxu0 %v399
    %457 = vmatpush1.bf16.msra.mxu0 %v398
    %458 = vmatprep.subr.bf16.mxu0 %v397
    %459 = vmatpush1.bf16.msra.mxu0 %v396
    %460 = vmatprep.subr.bf16.mxu0 %v395
    %461 = vmatpush1.bf16.msra.mxu0 %v394
    %462 = vmatprep.subr.bf16.mxu0 %v393
    %463 = vmatpush1.bf16.msra.mxu0 %v392
    %464 = vmatprep.subr.bf16.mxu0 %v391
    %465 = vmatpush1.bf16.msra.mxu0 %v390
    %466 = vmatprep.subr.bf16.mxu0 %v389
    %467 = vmatpush1.bf16.msra.mxu0 %v388
    %468 = vmatprep.subr.bf16.mxu0 %v419
    %469 = vmatpush2.bf16.msra.mxu0 %v418
    %470 = vmatprep.subr.bf16.mxu0 %v417
    %471 = vmatpush2.bf16.msra.mxu0 %v416
    %472 = vmatprep.subr.bf16.mxu0 %v415
    %473 = vmatpush2.bf16.msra.mxu0 %v414
    %474 = vmatprep.subr.bf16.mxu0 %v413
    %475 = vmatpush2.bf16.msra.mxu0 %v412
    %476 = vmatprep.subr.bf16.mxu0 %v411
    %477 = vmatpush2.bf16.msra.mxu0 %v410
    %478 = vmatprep.subr.bf16.mxu0 %v409
    %479 = vmatpush2.bf16.msra.mxu0 %v408
    %480 = vmatprep.subr.bf16.mxu0 %v407
    %481 = vmatpush2.bf16.msra.mxu0 %v406
    %482 = vmatprep.subr.bf16.mxu0 %v405
    %483 = vmatpush2.bf16.msra.mxu0 %v404
    %484 = vmatprep.mubr.bf16.mxu0 %v247
    %485 = vmatmul.mubr.bf16.gmra.mxu0 %v246
    %v486 = vpop.f32.mrf.mxu0
    %v487 = vadd.f32 %v285, %v486
    %v488 = vpop.f32.mrf.mxu0
    %v489 = vadd.f32 %v289, %v488
    %v490 = vpop.f32.mrf.mxu0
    %v491 = vadd.f32 %v285, %v490
    %v492 = vpop.f32.mrf.mxu0
    %v493 = vadd.f32 %v289, %v492
    %494 = vdwg.mxu0
    %v495 = vmax.f32 %v487, 0.0
    %v496 = vmax.f32 %v489, 0.0
    %v497 = vmax.f32 %v491, 0.0
    %v498 = vmax.f32 %v493, 0.0
    %v499 = vpack.c.bf16 %v497, %v495
    %v500 = vpack.c.bf16 %v498, %v496
    %v501 = vld [vmem:[#allocation8] sm:$0xf]
    %v502 = vld [vmem:[#allocation8 + $0x4] sm:$0xf]
    %v503 = vld [vmem:[#allocation8 + $0x8] sm:$0xf]
    %v504 = vld [vmem:[#allocation8 + $0xc] sm:$0xf]
    %v505 = vld [vmem:[#allocation8 + $0x10] sm:$0xf]
    %v506 = vld [vmem:[#allocation8 + $0x14] sm:$0xf]
    %v507 = vld [vmem:[#allocation8 + $0x18] sm:$0xf]
    %v508 = vld [vmem:[#allocation8 + $0x1c] sm:$0xf]
    %v509 = vld [vmem:[#allocation8 + $0x20] sm:$0xf]
    %v510 = vld [vmem:[#allocation8 + $0x24] sm:$0xf]
    %v511 = vld [vmem:[#allocation8 + $0x28] sm:$0xf]
    %v512 = vld [vmem:[#allocation8 + $0x2c] sm:$0xf]
    %v513 = vld [vmem:[#allocation8 + $0x30] sm:$0xf]
    %v514 = vld [vmem:[#allocation8 + $0x34] sm:$0xf]
    %v515 = vld [vmem:[#allocation8 + $0x38] sm:$0xf]
    %v516 = vld [vmem:[#allocation8 + $0x3c] sm:$0xf]
    %v517 = vld [vmem:[#allocation8 + $0x40] sm:$0xf]
    %v518 = vld [vmem:[#allocation8 + $0x44] sm:$0xf]
    %v519 = vld [vmem:[#allocation8 + $0x48] sm:$0xf]
    %v520 = vld [vmem:[#allocation8 + $0x4c] sm:$0xf]
    %v521 = vld [vmem:[#allocation8 + $0x50] sm:$0xf]
    %v522 = vld [vmem:[#allocation8 + $0x54] sm:$0xf]
    %v523 = vld [vmem:[#allocation8 + $0x58] sm:$0xf]
    %v524 = vld [vmem:[#allocation8 + $0x5c] sm:$0xf]
    %v525 = vld [vmem:[#allocation8 + $0x60] sm:$0xf]
    %v526 = vld [vmem:[#allocation8 + $0x64] sm:$0xf]
    %v527 = vld [vmem:[#allocation8 + $0x68] sm:$0xf]
    %v528 = vld [vmem:[#allocation8 + $0x6c] sm:$0xf]
    %v529 = vld [vmem:[#allocation8 + $0x70] sm:$0xf]
    %v530 = vld [vmem:[#allocation8 + $0x74] sm:$0xf]
    %v531 = vld [vmem:[#allocation8 + $0x78] sm:$0xf]
    %v532 = vld [vmem:[#allocation8 + $0x7c] sm:$0xf]
    %v533 = vld [vmem:[%s6] sm:$0x1]
    %v535 = vlaneseq
    %v536 = vshrl.u32 %v535, 7
    %v537 = vsub.s32 0, %v536
    %v538 = vrot.slane %v533, %v537
    %v572 = vunpack.c.l.b16 %v501
    %v573 = vunpack.c.l.b16 %v502
    %v574 = vunpack.c.l.b16 %v503
    %v575 = vunpack.c.l.b16 %v504
    %v576 = vunpack.c.l.b16 %v505
    %v577 = vunpack.c.l.b16 %v506
    %v578 = vunpack.c.l.b16 %v507
    %v579 = vunpack.c.l.b16 %v508
    %v580 = vunpack.c.l.b16 %v509
    %v581 = vunpack.c.l.b16 %v510
    %v582 = vunpack.c.l.b16 %v511
    %v583 = vunpack.c.l.b16 %v512
    %v584 = vunpack.c.l.b16 %v513
    %v585 = vunpack.c.l.b16 %v514
    %v586 = vunpack.c.l.b16 %v515
    %v587 = vunpack.c.l.b16 %v516
    %v588 = vunpack.c.l.b16 %v517
    %v589 = vunpack.c.l.b16 %v518
    %v590 = vunpack.c.l.b16 %v519
    %v591 = vunpack.c.l.b16 %v520
    %v592 = vunpack.c.l.b16 %v521
    %v593 = vunpack.c.l.b16 %v522
    %v594 = vunpack.c.l.b16 %v523
    %v595 = vunpack.c.l.b16 %v524
    %v596 = vunpack.c.l.b16 %v525
    %v597 = vunpack.c.l.b16 %v526
    %v598 = vunpack.c.l.b16 %v527
    %v599 = vunpack.c.l.b16 %v528
    %v600 = vunpack.c.l.b16 %v529
    %v601 = vunpack.c.l.b16 %v530
    %v602 = vunpack.c.l.b16 %v531
    %v603 = vunpack.c.l.b16 %v532
    %v604 = vpack.c.b16 %v573, %v572
    %v605 = vpack.c.b16 %v575, %v574
    %v606 = vpack.c.b16 %v577, %v576
    %v607 = vpack.c.b16 %v579, %v578
    %v608 = vpack.c.b16 %v581, %v580
    %v609 = vpack.c.b16 %v583, %v582
    %v610 = vpack.c.b16 %v585, %v584
    %v611 = vpack.c.b16 %v587, %v586
    %v612 = vpack.c.b16 %v589, %v588
    %v613 = vpack.c.b16 %v591, %v590
    %v614 = vpack.c.b16 %v593, %v592
    %v615 = vpack.c.b16 %v595, %v594
    %v616 = vpack.c.b16 %v597, %v596
    %v617 = vpack.c.b16 %v599, %v598
    %v618 = vpack.c.b16 %v601, %v600
    %v619 = vpack.c.b16 %v603, %v602
    %636 = vmatprep.subr.bf16.mxu0 0
    %637 = vmatpush1.bf16.msra.mxu0 %v611
    %638 = vmatprep.subr.bf16.mxu0 0
    %639 = vmatpush1.bf16.msra.mxu0 %v610
    %640 = vmatprep.subr.bf16.mxu0 0
    %641 = vmatpush1.bf16.msra.mxu0 %v609
    %642 = vmatprep.subr.bf16.mxu0 0
    %643 = vmatpush1.bf16.msra.mxu0 %v608
    %644 = vmatprep.subr.bf16.mxu0 0
    %645 = vmatpush1.bf16.msra.mxu0 %v607
    %646 = vmatprep.subr.bf16.mxu0 0
    %647 = vmatpush1.bf16.msra.mxu0 %v606
    %648 = vmatprep.subr.bf16.mxu0 0
    %649 = vmatpush1.bf16.msra.mxu0 %v605
    %650 = vmatprep.subr.bf16.mxu0 0
    %651 = vmatpush1.bf16.msra.mxu0 %v604
    %652 = vmatprep.subr.bf16.mxu0 0
    %653 = vmatpush2.bf16.msra.mxu0 %v619
    %654 = vmatprep.subr.bf16.mxu0 0
    %655 = vmatpush2.bf16.msra.mxu0 %v618
    %656 = vmatprep.subr.bf16.mxu0 0
    %657 = vmatpush2.bf16.msra.mxu0 %v617
    %658 = vmatprep.subr.bf16.mxu0 0
    %659 = vmatpush2.bf16.msra.mxu0 %v616
    %660 = vmatprep.subr.bf16.mxu0 0
    %661 = vmatpush2.bf16.msra.mxu0 %v615
    %662 = vmatprep.subr.bf16.mxu0 0
    %663 = vmatpush2.bf16.msra.mxu0 %v614
    %664 = vmatprep.subr.bf16.mxu0 0
    %665 = vmatpush2.bf16.msra.mxu0 %v613
    %666 = vmatprep.subr.bf16.mxu0 0
    %667 = vmatpush2.bf16.msra.mxu0 %v612
    %668 = vmatprep.mubr.bf16.mxu0 %v500
    %669 = vmatmul.mubr.bf16.gmra.mxu0 %v499
    %v670 = vpop.f32.mrf.mxu0
    %v671 = vadd.f32 %v538, %v670
    %v672 = vpop.f32.mrf.mxu0
    %v673 = vpop.f32.mrf.mxu0
    %v674 = vadd.f32 %v538, %v673
    %v675 = vpop.f32.mrf.mxu0
    %676 = vdwg.mxu0
    %677 = vmax.xlane.f32.xlu0 %v671
    %v678 = vpop.xlane.xlu0 %677
    %679 = vmax.xlane.f32.xlu0 %v674
    %v680 = vpop.xlane.xlu0 %679
    %v681 = vsub.f32 %v671, %v678
    %v682 = vsub.f32 %v674, %v680
    %v683 = vmul.f32 %v681, 1.442695
    %v684 = vpow.pop %v683
    %v685 = vmul.f32 %v682, 1.442695
    %v686 = vpow.pop %v685
    %687 = vadd.xlane.f32.xlu0 %v684
    %v688 = vpop.xlane.xlu0 %687
    %689 = vadd.xlane.f32.xlu0 %v686
    %v690 = vpop.xlane.xlu0 %689
    %v691 = vrcp.pop %v688
    %v692 = vrcp.pop %v690
    %v693 = vmul.f32 %v684, %v691
    %v694 = vmul.f32 %v686, %v692
    %v695 = vpack.c.bf16 %v694, %v693
    %v697 = vunpack.c.l.b16 %v695
    %v698 = vunpack.c.h.b16 %v695
    %v699 = vpack.c.b16 %v697, %v697
    %v700 = vpack.c.b16 %v698, %v698
    %703 = vst [vmem:[#allocation10] sm:$0xf] %v699
    %704 = vst [vmem:[#allocation10 + $0x4] sm:$0xf] %v700
    // Predicated region
    $region46: #{tpu_custom_call.1} parent=1 // pred_check
      _
    $region47: #{tpu_custom_call.1} parent=1 // pred_check_branch
      %706 = sbr.rel (0) target = $region49
    $region48: #{tpu_custom_call.1} parent=1 // pred_region
      %s708 = ssub.s32 128, 128
      %709 = vsyncadd [#allocation4], %s708
      %s710 = sshll.u32 [#allocation10], 4
      %s711 = int_to_ptr.vmem [resolvable:$true] %s710
      %716 = dma.vmem_to_hbm [thread:$0]  %s711, 128, %s7, [#allocation4], 64, 64, 4
    $region49: #{tpu_custom_call.1} parent=1 // pred_fallthru
      _
    // Predicated region
    $region50: #{tpu_custom_call.1} parent=1 // pred_check
      _
    $region51: #{tpu_custom_call.1} parent=1 // pred_check_branch
      %718 = sbr.rel (0) target = $region53
    $region52: #{tpu_custom_call.1} parent=1 // pred_region
      %719 = dma.done [#allocation4], 128
    $region53: #{tpu_custom_call.1} parent=1 // pred_fallthru
      _
    %720 = vsyncpa [#allocation3], 1
    %721 = vsyncpa [#allocation6], 1
    %722 = vsyncpa [#allocation9], 1
    %723 = vsyncpa [#allocation4], 1

</llo_original>
